<compile_context>
chip_gen: v7x
topology: tpu7x:2x2x1
jax: 0.10.0
libtpu: 0.0.40
codegen_flags: <defaults>
</compile_context>

<pallas_src>
import jax
import jax.numpy as jnp
from jax.experimental import pallas as pl
from jax.experimental.pallas import tpu as pltpu


_BLOCK_BYTE_BUDGET = 2 * 1024 * 1024    # ~2 MiB per block (85%+ of HBM roofline)
_LANE_WIDTH_CANDIDATES = (4096, 2048, 1024, 512, 256, 128)


def _double_kernel(x_ref, o_ref):
    # elementwise: out = x + x  (VPU; kernel is purely HBM-bandwidth bound)
    o_ref[...] = x_ref[...] + x_ref[...]


def _choose_lane_width(total):
    """Largest multiple of 128 (capped at 4096) that divides `total`, else 0."""
    for cand in _LANE_WIDTH_CANDIDATES:
        if total % cand == 0:
            return cand
    return 0


def _choose_row_tile(R, L, itemsize):
    """Byte-budgeted row tile: big blocks for bandwidth, >=2 grid steps for megacore."""
    if R <= 8:
        return R  # full extent along rows; block equals array dim -> always legal
    tile_r = _BLOCK_BYTE_BUDGET // (L * itemsize)
    tile_r = max(8, (tile_r // 8) * 8)
    tile_r = min(tile_r, R)
    if tile_r >= R and R >= 16:
        # Everything would fit in one block; split into >= 2 blocks so the
        # "parallel" row axis can shard across TensorCores (v7x) and the
        # input/output DMAs overlap with compute.
        half = -(-R // 2)
        tile_r = -(-half // 8) * 8
    return tile_r


def _double_flat(x2d):
    """Run the doubling kernel over a lane-dense (R, L) slab, tiled on rows."""
    R, L = x2d.shape
    tile_r = _choose_row_tile(R, L, x2d.dtype.itemsize)
    grid = (pl.cdiv(R, tile_r),)
    return pl.pallas_call(
        _double_kernel,
        out_shape=jax.ShapeDtypeStruct((R, L), x2d.dtype),
        grid=grid,
        in_specs=[pl.BlockSpec((tile_r, L), lambda i: (i, 0))],
        out_specs=pl.BlockSpec((tile_r, L), lambda i: (i, 0)),
        compiler_params=pltpu.CompilerParams(
            dimension_semantics=("parallel",),
            vmem_limit_bytes=32 * 1024 * 1024,
        ),
    )(x2d)


def _resolve_view_shape(total, shape):
    """Replicate torch.Tensor.view shape inference (a single -1 allowed)."""
    shape = list(shape)
    if shape.count(-1) > 1:
        raise ValueError("only one -1 allowed in view shape")
    if -1 in shape:
        known = 1
        for s in shape:
            if s != -1:
                known *= s
        if known == 0 or total % known != 0:
            raise ValueError(f"cannot view {total} elements as {shape}")
        shape[shape.index(-1)] = total // known
    else:
        prod = 1
        for s in shape:
            prod *= s
        if prod != total:
            raise ValueError(f"cannot view {total} elements as {shape}")
    return tuple(shape)


class SimpleViewModule:
    """JAX/Pallas equivalent of the PyTorch SimpleViewModule."""

    def __init__(self, *shape):
        self.shape = shape

    def __call__(self, tensor):
        total = tensor.size
        out_shape = _resolve_view_shape(total, self.shape)

        if total == 0:
            # Degenerate empty tensor: nothing to compute.
            return (tensor + tensor).reshape(out_shape)

        flat = tensor.reshape(-1)
        L = _choose_lane_width(total)
        if L == 0:
            # Not 128-divisible: pad to an (8,128)-aligned slab, run the tiled
            # kernel, and slice off the tail (never a single untiled block).
            L = 128
            padded = -(-total // (8 * L)) * (8 * L)
            flat = jnp.pad(flat, (0, padded - total))
            y = _double_flat(flat.reshape(padded // L, L)).reshape(-1)[:total]
        else:
            y = _double_flat(flat.reshape(total // L, L)).reshape(-1)

        # The view is free metadata-only glue done outside the kernel.
        return y.reshape(out_shape)


if __name__ == "__main__":
    key = jax.random.PRNGKey(0)
    k0, k1 = jax.random.split(key, 2)

    # 1) Small NCHW-like input consistent with the torch test harness.
    #    2048 elements -> lane-dense (1, 2048) slab, single grid step.
    x_small = jax.random.normal(k0, (2, 4, 16, 16), dtype=jnp.float32)
    out_small = SimpleViewModule(2, -1)(x_small)
    out_small = jax.block_until_ready(out_small)
    ref_small = (x_small + x_small).reshape(2, -1)
    assert out_small.shape == ref_small.shape
    assert out_small.dtype == ref_small.dtype
    assert bool(jnp.allclose(out_small, ref_small, atol=0.0, rtol=0.0))

    # 2) Awkward small input (total not divisible by 128) -> padded slab path.
    x_odd = jax.random.normal(k1, (2, 4, 9, 13), dtype=jnp.float32)
    out_odd = SimpleViewModule(2, -1)(x_odd)
    out_odd = jax.block_until_ready(out_odd)
    ref_odd = (x_odd + x_odd).reshape(2, -1)
    assert out_odd.shape == ref_odd.shape
    assert out_odd.dtype == ref_odd.dtype
    assert bool(jnp.allclose(out_odd, ref_odd, atol=0.0, rtol=0.0))

    print("KERNEL_OK")
</pallas_src>

<mosaic_0001>
module attributes {stable_mosaic.version = 11 : i64} {
  func.func @_double_kernel(%arg0: i32, %arg1: memref<1x2048xf32, #tpu.memory_space<vmem>>, %arg2: memref<1x2048xf32, #tpu.memory_space<vmem>>) attributes {dimension_semantics = [#tpu.dimension_semantics<parallel>], iteration_bounds = array<i64: 1>, scalar_prefetch = 0 : i64, scratch_operands = 0 : i64, tpu.core_type = #tpu.core_type<tc>, window_params = [{transform_indices = @transform_0, window_bounds = array<i64: 1, 2048>}, {transform_indices = @transform_1, window_bounds = array<i64: 1, 2048>}]} {
    %c0 = arith.constant 0 : index
    %c0_0 = arith.constant 0 : index
    %0 = vector.load %arg1[%c0, %c0_0] : memref<1x2048xf32, #tpu.memory_space<vmem>>, vector<1x2048xf32>
    %c0_1 = arith.constant 0 : index
    %c0_2 = arith.constant 0 : index
    %1 = vector.load %arg1[%c0_1, %c0_2] : memref<1x2048xf32, #tpu.memory_space<vmem>>, vector<1x2048xf32>
    %2 = arith.addf %0, %1 : vector<1x2048xf32>
    %c0_3 = arith.constant 0 : index
    %c0_4 = arith.constant 0 : index
    %3 = vector.load %arg2[%c0_3, %c0_4] : memref<1x2048xf32, #tpu.memory_space<vmem>>, vector<1x2048xf32>
    tpu.vector_store %arg2[%c0_3, %c0_4], %2 {strides = array<i32>} : memref<1x2048xf32, #tpu.memory_space<vmem>>, vector<1x2048xf32>,
    return
  }
  func.func @transform_0(%arg0: i32) -> (i32, i32) {
    %c0_i32 = arith.constant 0 : i32
    %c0_i32_0 = arith.constant 0 : i32
    return %arg0, %c0_i32 : i32, i32
  }
  func.func @transform_1(%arg0: i32) -> (i32, i32) {
    %c0_i32 = arith.constant 0 : i32
    %c0_i32_0 = arith.constant 0 : i32
    return %arg0, %c0_i32 : i32, i32
  }
}

</mosaic_0001>

<llo_original>
// kernel: tpu_custom_call.1
$region0: #{tpu_custom_call.1}
  #allocation0 [shape = 'u32[]', space=smem, size = 0x4, offset = 0x4, fixed_abs, tag = 'smem constant byte address 0x4 - core index']
  #allocation1 [shape = 'u32[144,128]{1,0:T(1,128)}', space=vmem, size = 0x12000, scoped, tag = 'internal scratch']
  %s0 = inlined_call_operand.hbm [shape: f32[1,2048], index: 0, kind: input, shape index: {}]
  %s1 = inlined_call_operand.hbm [shape: f32[1,2048], index: 1, kind: output, shape index: {}]
  %s2 = sld [smem:[#allocation0]]
  $region18: #{tpu_custom_call.1} parent=0
    _
  %s4 = ssub.s32 1, %s2
  %s5 = scalar_select 0, %s4, %s2
  $region1: #{tpu_custom_call.1} parent=0
    #allocation2 [shape = 'u8[8192]{0}', space=vmem, size = 0x2000, scoped, tag = 'input window, operand 0, single buffered']
    #allocation3 [shape = 's32[1]{0}', space=sflag, size = 0x4, scoped, tag = 'scoped memory for tpu_custom_call.1']
    #allocation4 [shape = 's32[1]{0}', space=sflag, size = 0x4, scoped, tag = 'scoped memory for tpu_custom_call.1']
    #allocation5 [shape = 'u8[8192]{0}', space=vmem, size = 0x2000, scoped, tag = 'output window, operand 0, single buffered']
    %6 = vsyncpa [#allocation3], 0
    %7 = vsyncpa [#allocation4], 0
    // Predicated region
    $region2: #{tpu_custom_call.1} parent=1 // pred_check
      _
    $region3: #{tpu_custom_call.1} parent=1 // pred_check_branch
      %9 = sbr.rel (0) target = $region5
    $region4: #{tpu_custom_call.1} parent=1 // pred_region
      %s11 = ssub.s32 256, 256
      %12 = vsyncadd [#allocation3], %s11
      %s14 = sshll.u32 [#allocation2], 4
      %s15 = int_to_ptr.vmem [resolvable:$true] %s14
      %17 = dma.hbm_to_vmem [thread:$0]  %s0, 256, %s15, [#allocation3]
    $region5: #{tpu_custom_call.1} parent=1 // pred_fallthru
      _
    // Predicated region
    $region6: #{tpu_custom_call.1} parent=1 // pred_check
      _
    $region7: #{tpu_custom_call.1} parent=1 // pred_check_branch
      %19 = sbr.rel (0) target = $region9
    $region8: #{tpu_custom_call.1} parent=1 // pred_region
      %20 = dma.done [#allocation3], 256
    $region9: #{tpu_custom_call.1} parent=1 // pred_fallthru
      _
    %v21 = vld [vmem:[#allocation2] sm:$0xff]
    %v22 = vld [vmem:[#allocation2 + $0x8] sm:$0xff]
    %v23 = vadd.f32 %v21, %v21
    %v24 = vadd.f32 %v22, %v22
    %25 = vst [vmem:[#allocation5] sm:$0xff] %v23
    %26 = vst [vmem:[#allocation5 + $0x8] sm:$0xff] %v24
    // Predicated region
    $region10: #{tpu_custom_call.1} parent=1 // pred_check
      _
    $region11: #{tpu_custom_call.1} parent=1 // pred_check_branch
      %28 = sbr.rel (0) target = $region13
    $region12: #{tpu_custom_call.1} parent=1 // pred_region
      %s30 = ssub.s32 256, 256
      %31 = vsyncadd [#allocation4], %s30
      %s33 = sshll.u32 [#allocation5], 4
      %s34 = int_to_ptr.vmem [resolvable:$true] %s33
      %36 = dma.vmem_to_hbm [thread:$0]  %s34, 256, %s1, [#allocation4]
    $region13: #{tpu_custom_call.1} parent=1 // pred_fallthru
      _
    // Predicated region
    $region14: #{tpu_custom_call.1} parent=1 // pred_check
      _
    $region15: #{tpu_custom_call.1} parent=1 // pred_check_branch
      %38 = sbr.rel (0) target = $region17
    $region16: #{tpu_custom_call.1} parent=1 // pred_region
      %39 = dma.done [#allocation4], 256
    $region17: #{tpu_custom_call.1} parent=1 // pred_fallthru
      _
    %40 = vsyncpa [#allocation3], 1
    %41 = vsyncpa [#allocation4], 1

</llo_original>
